<compile_context>
chip_gen: v5e
topology: v5e:2x2
jax: 0.10.0
libtpu: 0.0.40
codegen_flags: <defaults>
</compile_context>

<pallas_src>
import jax
import jax.numpy as jnp
from jax.experimental import pallas as pl
from jax.experimental.pallas import tpu as pltpu


def _fused_gemm_affine_relu_max_kernel(p_ref, w_ref, s_ref, b_ref, o_ref):
    """o = max_p relu( (p_ref[p] @ w) * scale + bias ), single grid step."""
    w = w_ref[...]
    s = s_ref[...]
    b = b_ref[...]
    acc = None
    for p in range(p_ref.shape[0]):          # static unroll (P = 4 or 1)
        y = jnp.dot(p_ref[p], w, preferred_element_type=jnp.float32)
        y = jnp.maximum(y * s + b, 0.0)
        acc = y if acc is None else jnp.maximum(acc, y)
    o_ref[...] = acc.astype(o_ref.dtype)


def fused_gemm_affine_relu_max(patches, w, scale, bias):
    """patches: (P, M, K) bf16, w: (K, N) bf16, scale/bias: (1, N) f32 -> (M, N) f32."""
    P, M, K = patches.shape
    K2, N = w.shape
    assert K == K2 and scale.shape == (1, N) and bias.shape == (1, N)
    return pl.pallas_call(
        _fused_gemm_affine_relu_max_kernel,
        out_shape=jax.ShapeDtypeStruct((M, N), jnp.float32),
        grid=(1,),
        in_specs=[
            pl.BlockSpec((P, M, K), lambda i: (0, 0, 0)),   # im2col patches
            pl.BlockSpec((K, N), lambda i: (0, 0)),         # weights (bf16)
            pl.BlockSpec((1, N), lambda i: (0, 0)),         # per-channel scale
            pl.BlockSpec((1, N), lambda i: (0, 0)),         # per-channel bias
        ],
        out_specs=pl.BlockSpec((M, N), lambda i: (0, 0)),
        compiler_params=pltpu.CompilerParams(
            dimension_semantics=("arbitrary",)),
    )(patches, w, scale, bias)


def _extract_conv_pool_patches(x):
    """x: (N, H, W, C) f32 -> (4, N*(H//2)*(W//2), 9*C) bf16.

    Axis 0 indexes the 4 positions of each 2x2 max-pool window; each row is
    the flattened 3x3 (padding=1) receptive field of the corresponding conv
    output pixel, so conv+BN+ReLU+pool becomes GEMM + max over axis 0.
    """
    n, h, w, c = x.shape
    assert h % 2 == 0 and w % 2 == 0
    ho, wo = h // 2, w // 2
    xp = jnp.pad(x, ((0, 0), (1, 1), (1, 1), (0, 0)))
    taps = [xp[:, dy:dy + h, dx:dx + w, :] for dy in range(3) for dx in range(3)]
    p = jnp.stack(taps, axis=3)                   # (N, H, W, 9, C), tap = dy*3+dx
    p = p.reshape(n, ho, 2, wo, 2, 9 * c)         # split H, W into pool windows
    p = p.transpose(2, 4, 0, 1, 3, 5)             # (py, px, N, Ho, Wo, 9C)
    return p.reshape(4, n * ho * wo, 9 * c).astype(jnp.bfloat16)


def _uniform(key, shape, bound):
    return jax.random.uniform(key, shape, jnp.float32, minval=-bound, maxval=bound)


class LABCNNPallas:
    """JAX/Pallas port of the PyTorch LABCNN forward pass (eval mode).

    BatchNorm uses running statistics (default init: mean=0, var=1, gamma=1,
    beta=0) folded together with the conv bias into a per-channel
    scale/shift applied inside the fused kernel.
    """
    # TODO(synk): training-mode BatchNorm (batch statistics + running-stat updates) is not implemented.

    EPS = 1e-5

    def __init__(self, image_size=(16, 16), out_dim=128, key=jax.random.PRNGKey(0)):
        assert image_size[0] % 8 == 0 and image_size[1] % 8 == 0
        self.image_size = image_size
        self.out_dim = out_dim
        chans = [3, 32, 64, 128]
        keys = jax.random.split(key, 4)

        self.blocks = []
        for li in range(3):
            cin, cout = chans[li], chans[li + 1]
            kw, kb = jax.random.split(keys[li])
            bound = 1.0 / (9 * cin) ** 0.5
            w = _uniform(kw, (3, 3, cin, cout), bound)     # HWIO
            b_conv = _uniform(kb, (cout,), bound)
            gamma = jnp.ones((cout,), jnp.float32)
            beta = jnp.zeros((cout,), jnp.float32)
            run_mean = jnp.zeros((cout,), jnp.float32)
            run_var = jnp.ones((cout,), jnp.float32)
            scale = gamma / jnp.sqrt(run_var + self.EPS)
            shift = (b_conv - run_mean) * scale + beta
            self.blocks.append(dict(
                w=w.reshape(9 * cin, cout).astype(jnp.bfloat16),
                scale=scale.reshape(1, cout),
                shift=shift.reshape(1, cout),
            ))

        feat = 128 * (image_size[0] // 8) * (image_size[1] // 8)
        kw, kb = jax.random.split(keys[3])
        bound = 1.0 / feat ** 0.5
        self.fc_w = _uniform(kw, (feat, out_dim), bound).astype(jnp.bfloat16)
        self.fc_scale = jnp.ones((1, out_dim), jnp.float32)
        self.fc_bias = _uniform(kb, (1, out_dim), bound)

    def _forward(self, x_nchw, gemm_fn):
        n = x_nchw.shape[0]
        x = jnp.transpose(x_nchw, (0, 2, 3, 1)).astype(jnp.float32)   # NHWC
        for blk in self.blocks:
            _, h, w, _ = x.shape
            patches = _extract_conv_pool_patches(x)                    # (4, M, 9*Cin)
            cout = blk["w"].shape[1]
            y = gemm_fn(patches, blk["w"], blk["scale"], blk["shift"])  # (M, Cout)
            x = y.reshape(n, h // 2, w // 2, cout)
        # flatten like torch's x.view(N, -1) on an NCHW tensor
        feats = jnp.transpose(x, (0, 3, 1, 2)).reshape(n, -1)
        fc_in = feats.astype(jnp.bfloat16)[None]                        # (1, N, F)
        return gemm_fn(fc_in, self.fc_w, self.fc_scale, self.fc_bias)   # (N, out_dim)

    def __call__(self, x_nchw):
        return self._forward(x_nchw, fused_gemm_affine_relu_max)

    def forward_reference(self, x_nchw):
        """Pure-JAX reference mirroring the exact bf16 quantization of the kernel path."""
        def ref_gemm(patches, w, scale, bias):
            y = jnp.einsum(
                "pmk,kn->pmn",
                patches.astype(jnp.float32), w.astype(jnp.float32),
                precision=jax.lax.Precision.HIGHEST)
            y = jnp.maximum(y * scale + bias, 0.0)
            return jnp.max(y, axis=0)
        return self._forward(x_nchw, ref_gemm)


if __name__ == "__main__":
    key = jax.random.PRNGKey(0)
    k_x, k_params = jax.random.split(key)

    batch, image_size, out_dim = 2, (16, 16), 128
    x = jax.random.normal(k_x, (batch, 3, *image_size), jnp.float32)

    model = LABCNNPallas(image_size=image_size, out_dim=out_dim, key=k_params)
    y = model(x)
    y = jax.block_until_ready(y)

    y_ref = model.forward_reference(x)
    assert y.shape == (batch, out_dim)
    assert jnp.allclose(y, y_ref, atol=5e-3, rtol=5e-3), \
        float(jnp.max(jnp.abs(y - y_ref)))

    print("KERNEL_OK")
</pallas_src>

<mosaic_0001>
module attributes {stable_mosaic.version = 11 : i64} {
  func.func @_fused_gemm_affine_relu_max_kernel(%arg0: i32, %arg1: memref<4x128x27xbf16, #tpu.memory_space<vmem>>, %arg2: memref<27x32xbf16, #tpu.memory_space<vmem>>, %arg3: memref<1x32xf32, #tpu.memory_space<vmem>>, %arg4: memref<1x32xf32, #tpu.memory_space<vmem>>, %arg5: memref<128x32xf32, #tpu.memory_space<vmem>>) attributes {dimension_semantics = [#tpu.dimension_semantics<arbitrary>], iteration_bounds = array<i64: 1>, scalar_prefetch = 0 : i64, scratch_operands = 0 : i64, tpu.core_type = #tpu.core_type<tc>, window_params = [{pipeline_mode = #tpu.pipeline_mode<synchronous>, transform_indices = @transform_0, window_bounds = array<i64: 4, 128, 27>}, {pipeline_mode = #tpu.pipeline_mode<synchronous>, transform_indices = @transform_1, window_bounds = array<i64: 27, 32>}, {pipeline_mode = #tpu.pipeline_mode<synchronous>, transform_indices = @transform_2, window_bounds = array<i64: 1, 32>}, {pipeline_mode = #tpu.pipeline_mode<synchronous>, transform_indices = @transform_3, window_bounds = array<i64: 1, 32>}, {pipeline_mode = #tpu.pipeline_mode<synchronous>, transform_indices = @transform_4, window_bounds = array<i64: 128, 32>}]} {
    %c0 = arith.constant 0 : index
    %c0_0 = arith.constant 0 : index
    %0 = vector.load %arg2[%c0, %c0_0] : memref<27x32xbf16, #tpu.memory_space<vmem>>, vector<27x32xbf16>
    %c0_1 = arith.constant 0 : index
    %c0_2 = arith.constant 0 : index
    %1 = vector.load %arg3[%c0_1, %c0_2] : memref<1x32xf32, #tpu.memory_space<vmem>>, vector<1x32xf32>
    %c0_3 = arith.constant 0 : index
    %c0_4 = arith.constant 0 : index
    %2 = vector.load %arg4[%c0_3, %c0_4] : memref<1x32xf32, #tpu.memory_space<vmem>>, vector<1x32xf32>
    %c0_5 = arith.constant 0 : index
    %c0_6 = arith.constant 0 : index
    %c0_7 = arith.constant 0 : index
    %3 = vector.load %arg1[%c0_5, %c0_6, %c0_7] : memref<4x128x27xbf16, #tpu.memory_space<vmem>>, vector<1x128x27xbf16>
    %4 = vector.shape_cast %3 : vector<1x128x27xbf16> to vector<128x27xbf16>
    %cst = arith.constant dense<0.000000e+00> : vector<128x32xf32>
    %5 = tpu.matmul %4, %0, %cst {dimension_numbers = #tpu.dot_dimension_numbers<[1], [0], [0], [1], [0, 0, 1, 1], [], []>} : vector<128x27xbf16>, vector<27x32xbf16>, vector<128x32xf32> -> vector<128x32xf32>
    %6 = vector.broadcast %1 : vector<1x32xf32> to vector<128x32xf32>
    %7 = arith.mulf %5, %6 : vector<128x32xf32>
    %8 = vector.broadcast %2 : vector<1x32xf32> to vector<128x32xf32>
    %9 = arith.addf %7, %8 : vector<128x32xf32>
    %cst_8 = arith.constant 0.000000e+00 : f32
    %10 = vector.broadcast %cst_8 : f32 to vector<128x32xf32>
    %11 = arith.maximumf %9, %10 : vector<128x32xf32>
    %c1 = arith.constant 1 : index
    %c0_9 = arith.constant 0 : index
    %c0_10 = arith.constant 0 : index
    %12 = vector.load %arg1[%c1, %c0_9, %c0_10] : memref<4x128x27xbf16, #tpu.memory_space<vmem>>, vector<1x128x27xbf16>
    %13 = vector.shape_cast %12 : vector<1x128x27xbf16> to vector<128x27xbf16>
    %cst_11 = arith.constant dense<0.000000e+00> : vector<128x32xf32>
    %14 = tpu.matmul %13, %0, %cst_11 {dimension_numbers = #tpu.dot_dimension_numbers<[1], [0], [0], [1], [0, 0, 1, 1], [], []>} : vector<128x27xbf16>, vector<27x32xbf16>, vector<128x32xf32> -> vector<128x32xf32>
    %15 = vector.broadcast %1 : vector<1x32xf32> to vector<128x32xf32>
    %16 = arith.mulf %14, %15 : vector<128x32xf32>
    %17 = vector.broadcast %2 : vector<1x32xf32> to vector<128x32xf32>
    %18 = arith.addf %16, %17 : vector<128x32xf32>
    %cst_12 = arith.constant 0.000000e+00 : f32
    %19 = vector.broadcast %cst_12 : f32 to vector<128x32xf32>
    %20 = arith.maximumf %18, %19 : vector<128x32xf32>
    %21 = arith.maximumf %11, %20 : vector<128x32xf32>
    %c2 = arith.constant 2 : index
    %c0_13 = arith.constant 0 : index
    %c0_14 = arith.constant 0 : index
    %22 = vector.load %arg1[%c2, %c0_13, %c0_14] : memref<4x128x27xbf16, #tpu.memory_space<vmem>>, vector<1x128x27xbf16>
    %23 = vector.shape_cast %22 : vector<1x128x27xbf16> to vector<128x27xbf16>
    %cst_15 = arith.constant dense<0.000000e+00> : vector<128x32xf32>
    %24 = tpu.matmul %23, %0, %cst_15 {dimension_numbers = #tpu.dot_dimension_numbers<[1], [0], [0], [1], [0, 0, 1, 1], [], []>} : vector<128x27xbf16>, vector<27x32xbf16>, vector<128x32xf32> -> vector<128x32xf32>
    %25 = vector.broadcast %1 : vector<1x32xf32> to vector<128x32xf32>
    %26 = arith.mulf %24, %25 : vector<128x32xf32>
    %27 = vector.broadcast %2 : vector<1x32xf32> to vector<128x32xf32>
    %28 = arith.addf %26, %27 : vector<128x32xf32>
    %cst_16 = arith.constant 0.000000e+00 : f32
    %29 = vector.broadcast %cst_16 : f32 to vector<128x32xf32>
    %30 = arith.maximumf %28, %29 : vector<128x32xf32>
    %31 = arith.maximumf %21, %30 : vector<128x32xf32>
    %c3 = arith.constant 3 : index
    %c0_17 = arith.constant 0 : index
    %c0_18 = arith.constant 0 : index
    %32 = vector.load %arg1[%c3, %c0_17, %c0_18] : memref<4x128x27xbf16, #tpu.memory_space<vmem>>, vector<1x128x27xbf16>
    %33 = vector.shape_cast %32 : vector<1x128x27xbf16> to vector<128x27xbf16>
    %cst_19 = arith.constant dense<0.000000e+00> : vector<128x32xf32>
    %34 = tpu.matmul %33, %0, %cst_19 {dimension_numbers = #tpu.dot_dimension_numbers<[1], [0], [0], [1], [0, 0, 1, 1], [], []>} : vector<128x27xbf16>, vector<27x32xbf16>, vector<128x32xf32> -> vector<128x32xf32>
    %35 = vector.broadcast %1 : vector<1x32xf32> to vector<128x32xf32>
    %36 = arith.mulf %34, %35 : vector<128x32xf32>
    %37 = vector.broadcast %2 : vector<1x32xf32> to vector<128x32xf32>
    %38 = arith.addf %36, %37 : vector<128x32xf32>
    %cst_20 = arith.constant 0.000000e+00 : f32
    %39 = vector.broadcast %cst_20 : f32 to vector<128x32xf32>
    %40 = arith.maximumf %38, %39 : vector<128x32xf32>
    %41 = arith.maximumf %31, %40 : vector<128x32xf32>
    %c0_21 = arith.constant 0 : index
    %c0_22 = arith.constant 0 : index
    %42 = vector.load %arg5[%c0_21, %c0_22] : memref<128x32xf32, #tpu.memory_space<vmem>>, vector<128x32xf32>
    tpu.vector_store %arg5[%c0_21, %c0_22], %41 {strides = array<i32>} : memref<128x32xf32, #tpu.memory_space<vmem>>, vector<128x32xf32>,
    return
  }
  func.func @transform_0(%arg0: i32) -> (i32, i32, i32) {
    %c0_i32 = arith.constant 0 : i32
    %c0_i32_0 = arith.constant 0 : i32
    %c0_i32_1 = arith.constant 0 : i32
    %c0_i32_2 = arith.constant 0 : i32
    return %c0_i32, %c0_i32_0, %c0_i32_1 : i32, i32, i32
  }
  func.func @transform_1(%arg0: i32) -> (i32, i32) {
    %c0_i32 = arith.constant 0 : i32
    %c0_i32_0 = arith.constant 0 : i32
    %c0_i32_1 = arith.constant 0 : i32
    return %c0_i32, %c0_i32_0 : i32, i32
  }
  func.func @transform_2(%arg0: i32) -> (i32, i32) {
    %c0_i32 = arith.constant 0 : i32
    %c0_i32_0 = arith.constant 0 : i32
    %c0_i32_1 = arith.constant 0 : i32
    return %c0_i32, %c0_i32_0 : i32, i32
  }
  func.func @transform_3(%arg0: i32) -> (i32, i32) {
    %c0_i32 = arith.constant 0 : i32
    %c0_i32_0 = arith.constant 0 : i32
    %c0_i32_1 = arith.constant 0 : i32
    return %c0_i32, %c0_i32_0 : i32, i32
  }
  func.func @transform_4(%arg0: i32) -> (i32, i32) {
    %c0_i32 = arith.constant 0 : i32
    %c0_i32_0 = arith.constant 0 : i32
    %c0_i32_1 = arith.constant 0 : i32
    return %c0_i32, %c0_i32_0 : i32, i32
  }
}

</mosaic_0001>

<llo_original>
// kernel: tpu_custom_call.1
$region0: #{tpu_custom_call.1}
  #allocation0 [shape = 'u32[]', space=smem, size = 0x4, offset = 0x4, fixed_abs, tag = 'smem constant byte address 0x4 - core index']
  #allocation1 [shape = 'u32[72,128]{1,0:T(1,128)}', space=vmem, size = 0x9000, scoped, tag = 'internal scratch']
  %s0 = inlined_call_operand.vmem [shape: bf16[4,128,27], index: 0, kind: input, shape index: {}]
  %s1 = inlined_call_operand.vmem [shape: bf16[27,32], index: 1, kind: input, shape index: {}]
  %s2 = inlined_call_operand.vmem [shape: f32[1,32], index: 2, kind: input, shape index: {}]
  %s3 = inlined_call_operand.vmem [shape: f32[1,32], index: 3, kind: input, shape index: {}]
  %s4 = inlined_call_operand.vmem [shape: f32[128,32], index: 4, kind: output, shape index: {}]
  %s5 = sld [smem:[#allocation0]]
  $region26: #{tpu_custom_call.1} parent=0
    _
  %s7 = ssub.s32 1, %s5
  %s8 = scalar_select 0, %s7, %s5
  // Predicated region
  $region2: #{tpu_custom_call.1} parent=0 // pred_check
    _
  $region3: #{tpu_custom_call.1} parent=0 // pred_check_branch
    %10 = sbr.rel (0) target = $region5
  $region4: #{tpu_custom_call.1} parent=0 // pred_region
    _
  $region5: #{tpu_custom_call.1} parent=0 // pred_fallthru
    _
  // Predicated region
  $region6: #{tpu_custom_call.1} parent=0 // pred_check
    _
  $region7: #{tpu_custom_call.1} parent=0 // pred_check_branch
    %12 = sbr.rel (0) target = $region9
  $region8: #{tpu_custom_call.1} parent=0 // pred_region
    _
  $region9: #{tpu_custom_call.1} parent=0 // pred_fallthru
    _
  // Predicated region
  $region10: #{tpu_custom_call.1} parent=0 // pred_check
    _
  $region11: #{tpu_custom_call.1} parent=0 // pred_check_branch
    %14 = sbr.rel (0) target = $region13
  $region12: #{tpu_custom_call.1} parent=0 // pred_region
    _
  $region13: #{tpu_custom_call.1} parent=0 // pred_fallthru
    _
  // Predicated region
  $region14: #{tpu_custom_call.1} parent=0 // pred_check
    _
  $region15: #{tpu_custom_call.1} parent=0 // pred_check_branch
    %16 = sbr.rel (0) target = $region17
  $region16: #{tpu_custom_call.1} parent=0 // pred_region
    _
  $region17: #{tpu_custom_call.1} parent=0 // pred_fallthru
    _
  %v18 = vld [vmem:[%s1] sm:$0xf]
  %v19 = vld [vmem:[%s1 + $0x4] sm:$0xf]
  %v20 = vld [vmem:[%s1 + $0x8] sm:$0xf]
  %v21 = vld [vmem:[%s1 + $0xc] sm:$0x3]
  %v22 = vld [vmem:[%s2] sm:$0x1]
  %v23 = vld [vmem:[%s3] sm:$0x1]
  %v24 = vld [vmem:[%s0] sm:$0xf]
  %v25 = vld [vmem:[%s0 + $0x4] sm:$0xf]
  %v26 = vld [vmem:[%s0 + $0x8] sm:$0xf]
  %v27 = vld [vmem:[%s0 + $0xc] sm:$0xf]
  %v28 = vld [vmem:[%s0 + $0x10] sm:$0xf]
  %v29 = vld [vmem:[%s0 + $0x14] sm:$0xf]
  %v30 = vld [vmem:[%s0 + $0x18] sm:$0xf]
  %v31 = vld [vmem:[%s0 + $0x1c] sm:$0xf]
  %v32 = vld [vmem:[%s0 + $0x20] sm:$0xf]
  %v33 = vld [vmem:[%s0 + $0x24] sm:$0xf]
  %v34 = vld [vmem:[%s0 + $0x28] sm:$0xf]
  %v35 = vld [vmem:[%s0 + $0x2c] sm:$0xf]
  %v36 = vld [vmem:[%s0 + $0x30] sm:$0xf]
  %v37 = vld [vmem:[%s0 + $0x34] sm:$0xf]
  %v38 = vld [vmem:[%s0 + $0x38] sm:$0xf]
  %v39 = vld [vmem:[%s0 + $0x3c] sm:$0xf]
  %v56 = vunpack.c.l.b16 %v24
  %v57 = vunpack.c.l.b16 %v25
  %v58 = vunpack.c.l.b16 %v26
  %v59 = vunpack.c.l.b16 %v27
  %v60 = vunpack.c.l.b16 %v28
  %v61 = vunpack.c.l.b16 %v29
  %v62 = vunpack.c.l.b16 %v30
  %v63 = vunpack.c.l.b16 %v31
  %v64 = vunpack.c.l.b16 %v32
  %v65 = vunpack.c.l.b16 %v33
  %v66 = vunpack.c.l.b16 %v34
  %v67 = vunpack.c.l.b16 %v35
  %v68 = vunpack.c.l.b16 %v36
  %v69 = vunpack.c.l.b16 %v37
  %v70 = vunpack.c.l.b16 %v38
  %v71 = vunpack.c.l.b16 %v39
  %v72 = vpack.c.b16 %v57, %v56
  %v73 = vpack.c.b16 %v59, %v58
  %v74 = vpack.c.b16 %v61, %v60
  %v75 = vpack.c.b16 %v63, %v62
  %v76 = vpack.c.b16 %v65, %v64
  %v77 = vpack.c.b16 %v67, %v66
  %v78 = vpack.c.b16 %v69, %v68
  %v79 = vpack.c.b16 %v71, %v70
  %v84 = vunpack.c.l.b16 %v18
  %v85 = vunpack.c.l.b16 %v19
  %v86 = vunpack.c.l.b16 %v20
  %v87 = vunpack.c.l.b16 %v21
  %v88 = vpack.c.b16 %v85, %v84
  %v89 = vpack.c.b16 %v87, %v86
  %vm91 = vcmask 220160
  %v93 = vsel %vm91, %v72, 0
  %v96 = vsel %vm91, %v73, 0
  %v99 = vsel %vm91, %v74, 0
  %v102 = vsel %vm91, %v75, 0
  %v105 = vsel %vm91, %v76, 0
  %v108 = vsel %vm91, %v77, 0
  %v111 = vsel %vm91, %v78, 0
  %v114 = vsel %vm91, %v79, 0
  %vm116 = vcmask 1044480
  %vm117 = vcmask 1045504
  %v118 = vsel %vm116, 4294967295, 65535
  %v119 = vsel %vm117, %v118, 0
  %v121 = vand.u32 %v89, %v119
  %123 = vmatpush.bf16.msra.mxu0 0
  %124 = vmatpush.bf16.msra.mxu0 0
  %125 = vmatpush.bf16.msra.mxu0 0
  %126 = vmatpush.bf16.msra.mxu0 0
  %127 = vmatpush.bf16.msra.mxu0 0
  %128 = vmatpush.bf16.msra.mxu0 0
  %129 = vmatpush.bf16.msra.mxu0 %v121
  %130 = vmatpush.bf16.msra.mxu0 %v88
  %131 = vmatmul.bf16.gmra.mxu0 %v93
  %v132 = vpop.f32.mrf.mxu0
  %v133 = vadd.f32 0.0, %v132
  %v134 = vpop.f32.mrf.mxu0
  %v135 = vadd.f32 0.0, %v134
  %136 = vmatmul.bf16.gmra.mxu0 %v96
  %v137 = vpop.f32.mrf.mxu0
  %v138 = vadd.f32 0.0, %v137
  %v139 = vpop.f32.mrf.mxu0
  %v140 = vadd.f32 0.0, %v139
  %141 = vmatmul.bf16.gmra.mxu0 %v99
  %v142 = vpop.f32.mrf.mxu0
  %v143 = vadd.f32 0.0, %v142
  %v144 = vpop.f32.mrf.mxu0
  %v145 = vadd.f32 0.0, %v144
  %146 = vmatmul.bf16.gmra.mxu0 %v102
  %v147 = vpop.f32.mrf.mxu0
  %v148 = vadd.f32 0.0, %v147
  %v149 = vpop.f32.mrf.mxu0
  %v150 = vadd.f32 0.0, %v149
  %151 = vmatmul.bf16.gmra.mxu0 %v105
  %v152 = vpop.f32.mrf.mxu0
  %v153 = vadd.f32 0.0, %v152
  %v154 = vpop.f32.mrf.mxu0
  %v155 = vadd.f32 0.0, %v154
  %156 = vmatmul.bf16.gmra.mxu0 %v108
  %v157 = vpop.f32.mrf.mxu0
  %v158 = vadd.f32 0.0, %v157
  %v159 = vpop.f32.mrf.mxu0
  %v160 = vadd.f32 0.0, %v159
  %161 = vmatmul.bf16.gmra.mxu0 %v111
  %v162 = vpop.f32.mrf.mxu0
  %v163 = vadd.f32 0.0, %v162
  %v164 = vpop.f32.mrf.mxu0
  %v165 = vadd.f32 0.0, %v164
  %166 = vmatmul.bf16.gmra.mxu0 %v114
  %v167 = vpop.f32.mrf.mxu0
  %v168 = vadd.f32 0.0, %v167
  %v169 = vpop.f32.mrf.mxu0
  %v170 = vadd.f32 0.0, %v169
  %171 = vdwg.mxu0
  %v173 = vperm.slane %v22, 0
  %v175 = vmul.f32 %v133, %v173
  %v176 = vmul.f32 %v135, %v173
  %v177 = vmul.f32 %v138, %v173
  %v178 = vmul.f32 %v140, %v173
  %v179 = vmul.f32 %v143, %v173
  %v180 = vmul.f32 %v145, %v173
  %v181 = vmul.f32 %v148, %v173
  %v182 = vmul.f32 %v150, %v173
  %v183 = vmul.f32 %v153, %v173
  %v184 = vmul.f32 %v155, %v173
  %v185 = vmul.f32 %v158, %v173
  %v186 = vmul.f32 %v160, %v173
  %v187 = vmul.f32 %v163, %v173
  %v188 = vmul.f32 %v165, %v173
  %v189 = vmul.f32 %v168, %v173
  %v190 = vmul.f32 %v170, %v173
  %v192 = vperm.slane %v23, 0
  %v194 = vadd.f32 %v175, %v192
  %v195 = vadd.f32 %v176, %v192
  %v196 = vadd.f32 %v177, %v192
  %v197 = vadd.f32 %v178, %v192
  %v198 = vadd.f32 %v179, %v192
  %v199 = vadd.f32 %v180, %v192
  %v200 = vadd.f32 %v181, %v192
  %v201 = vadd.f32 %v182, %v192
  %v202 = vadd.f32 %v183, %v192
  %v203 = vadd.f32 %v184, %v192
  %v204 = vadd.f32 %v185, %v192
  %v205 = vadd.f32 %v186, %v192
  %v206 = vadd.f32 %v187, %v192
  %v207 = vadd.f32 %v188, %v192
  %v208 = vadd.f32 %v189, %v192
  %v209 = vadd.f32 %v190, %v192
  %v210 = vmax.f32 %v194, 0.0
  %v211 = vmax.f32 %v195, 0.0
  %v212 = vmax.f32 %v196, 0.0
  %v213 = vmax.f32 %v197, 0.0
  %v214 = vmax.f32 %v198, 0.0
  %v215 = vmax.f32 %v199, 0.0
  %v216 = vmax.f32 %v200, 0.0
  %v217 = vmax.f32 %v201, 0.0
  %v218 = vmax.f32 %v202, 0.0
  %v219 = vmax.f32 %v203, 0.0
  %v220 = vmax.f32 %v204, 0.0
  %v221 = vmax.f32 %v205, 0.0
  %v222 = vmax.f32 %v206, 0.0
  %v223 = vmax.f32 %v207, 0.0
  %v224 = vmax.f32 %v208, 0.0
  %v225 = vmax.f32 %v209, 0.0
  %s226 = scalar_lea.vmem %s0, 64
  %v227 = vld [vmem:[%s226] sm:$0xf]
  %v228 = vld [vmem:[%s226 + $0x4] sm:$0xf]
  %v229 = vld [vmem:[%s226 + $0x8] sm:$0xf]
  %v230 = vld [vmem:[%s226 + $0xc] sm:$0xf]
  %v231 = vld [vmem:[%s226 + $0x10] sm:$0xf]
  %v232 = vld [vmem:[%s226 + $0x14] sm:$0xf]
  %v233 = vld [vmem:[%s226 + $0x18] sm:$0xf]
  %v234 = vld [vmem:[%s226 + $0x1c] sm:$0xf]
  %v235 = vld [vmem:[%s226 + $0x20] sm:$0xf]
  %v236 = vld [vmem:[%s226 + $0x24] sm:$0xf]
  %v237 = vld [vmem:[%s226 + $0x28] sm:$0xf]
  %v238 = vld [vmem:[%s226 + $0x2c] sm:$0xf]
  %v239 = vld [vmem:[%s226 + $0x30] sm:$0xf]
  %v240 = vld [vmem:[%s226 + $0x34] sm:$0xf]
  %v241 = vld [vmem:[%s226 + $0x38] sm:$0xf]
  %v242 = vld [vmem:[%s226 + $0x3c] sm:$0xf]
  %v259 = vunpack.c.l.b16 %v227
  %v260 = vunpack.c.l.b16 %v228
  %v261 = vunpack.c.l.b16 %v229
  %v262 = vunpack.c.l.b16 %v230
  %v263 = vunpack.c.l.b16 %v231
  %v264 = vunpack.c.l.b16 %v232
  %v265 = vunpack.c.l.b16 %v233
  %v266 = vunpack.c.l.b16 %v234
  %v267 = vunpack.c.l.b16 %v235
  %v268 = vunpack.c.l.b16 %v236
  %v269 = vunpack.c.l.b16 %v237
  %v270 = vunpack.c.l.b16 %v238
  %v271 = vunpack.c.l.b16 %v239
  %v272 = vunpack.c.l.b16 %v240
  %v273 = vunpack.c.l.b16 %v241
  %v274 = vunpack.c.l.b16 %v242
  %v275 = vpack.c.b16 %v260, %v259
  %v276 = vpack.c.b16 %v262, %v261
  %v277 = vpack.c.b16 %v264, %v263
  %v278 = vpack.c.b16 %v266, %v265
  %v279 = vpack.c.b16 %v268, %v267
  %v280 = vpack.c.b16 %v270, %v269
  %v281 = vpack.c.b16 %v272, %v271
  %v282 = vpack.c.b16 %v274, %v273
  %v284 = vsel %vm91, %v275, 0
  %v287 = vsel %vm91, %v276, 0
  %v290 = vsel %vm91, %v277, 0
  %v293 = vsel %vm91, %v278, 0
  %v296 = vsel %vm91, %v279, 0
  %v299 = vsel %vm91, %v280, 0
  %v302 = vsel %vm91, %v281, 0
  %v305 = vsel %vm91, %v282, 0
  %307 = vmatpush.bf16.msra.mxu0 0
  %308 = vmatpush.bf16.msra.mxu0 0
  %309 = vmatpush.bf16.msra.mxu0 0
  %310 = vmatpush.bf16.msra.mxu0 0
  %311 = vmatpush.bf16.msra.mxu0 0
  %312 = vmatpush.bf16.msra.mxu0 0
  %313 = vmatpush.bf16.msra.mxu0 %v121
  %314 = vmatpush.bf16.msra.mxu0 %v88
  %315 = vmatmul.bf16.gmra.mxu0 %v284
  %v316 = vpop.f32.mrf.mxu0
  %v317 = vadd.f32 0.0, %v316
  %v318 = vpop.f32.mrf.mxu0
  %v319 = vadd.f32 0.0, %v318
  %320 = vmatmul.bf16.gmra.mxu0 %v287
  %v321 = vpop.f32.mrf.mxu0
  %v322 = vadd.f32 0.0, %v321
  %v323 = vpop.f32.mrf.mxu0
  %v324 = vadd.f32 0.0, %v323
  %325 = vmatmul.bf16.gmra.mxu0 %v290
  %v326 = vpop.f32.mrf.mxu0
  %v327 = vadd.f32 0.0, %v326
  %v328 = vpop.f32.mrf.mxu0
  %v329 = vadd.f32 0.0, %v328
  %330 = vmatmul.bf16.gmra.mxu0 %v293
  %v331 = vpop.f32.mrf.mxu0
  %v332 = vadd.f32 0.0, %v331
  %v333 = vpop.f32.mrf.mxu0
  %v334 = vadd.f32 0.0, %v333
  %335 = vmatmul.bf16.gmra.mxu0 %v296
  %v336 = vpop.f32.mrf.mxu0
  %v337 = vadd.f32 0.0, %v336
  %v338 = vpop.f32.mrf.mxu0
  %v339 = vadd.f32 0.0, %v338
  %340 = vmatmul.bf16.gmra.mxu0 %v299
  %v341 = vpop.f32.mrf.mxu0
  %v342 = vadd.f32 0.0, %v341
  %v343 = vpop.f32.mrf.mxu0
  %v344 = vadd.f32 0.0, %v343
  %345 = vmatmul.bf16.gmra.mxu0 %v302
  %v346 = vpop.f32.mrf.mxu0
  %v347 = vadd.f32 0.0, %v346
  %v348 = vpop.f32.mrf.mxu0
  %v349 = vadd.f32 0.0, %v348
  %350 = vmatmul.bf16.gmra.mxu0 %v305
  %v351 = vpop.f32.mrf.mxu0
  %v352 = vadd.f32 0.0, %v351
  %v353 = vpop.f32.mrf.mxu0
  %v354 = vadd.f32 0.0, %v353
  %355 = vdwg.mxu0
  %v356 = vmul.f32 %v317, %v173
  %v357 = vmul.f32 %v319, %v173
  %v358 = vmul.f32 %v322, %v173
  %v359 = vmul.f32 %v324, %v173
  %v360 = vmul.f32 %v327, %v173
  %v361 = vmul.f32 %v329, %v173
  %v362 = vmul.f32 %v332, %v173
  %v363 = vmul.f32 %v334, %v173
  %v364 = vmul.f32 %v337, %v173
  %v365 = vmul.f32 %v339, %v173
  %v366 = vmul.f32 %v342, %v173
  %v367 = vmul.f32 %v344, %v173
  %v368 = vmul.f32 %v347, %v173
  %v369 = vmul.f32 %v349, %v173
  %v370 = vmul.f32 %v352, %v173
  %v371 = vmul.f32 %v354, %v173
  %v372 = vadd.f32 %v356, %v192
  %v373 = vadd.f32 %v357, %v192
  %v374 = vadd.f32 %v358, %v192
  %v375 = vadd.f32 %v359, %v192
  %v376 = vadd.f32 %v360, %v192
  %v377 = vadd.f32 %v361, %v192
  %v378 = vadd.f32 %v362, %v192
  %v379 = vadd.f32 %v363, %v192
  %v380 = vadd.f32 %v364, %v192
  %v381 = vadd.f32 %v365, %v192
  %v382 = vadd.f32 %v366, %v192
  %v383 = vadd.f32 %v367, %v192
  %v384 = vadd.f32 %v368, %v192
  %v385 = vadd.f32 %v369, %v192
  %v386 = vadd.f32 %v370, %v192
  %v387 = vadd.f32 %v371, %v192
  %v388 = vmax.f32 %v372, 0.0
  %v389 = vmax.f32 %v373, 0.0
  %v390 = vmax.f32 %v374, 0.0
  %v391 = vmax.f32 %v375, 0.0
  %v392 = vmax.f32 %v376, 0.0
  %v393 = vmax.f32 %v377, 0.0
  %v394 = vmax.f32 %v378, 0.0
  %v395 = vmax.f32 %v379, 0.0
  %v396 = vmax.f32 %v380, 0.0
  %v397 = vmax.f32 %v381, 0.0
  %v398 = vmax.f32 %v382, 0.0
  %v399 = vmax.f32 %v383, 0.0
  %v400 = vmax.f32 %v384, 0.0
  %v401 = vmax.f32 %v385, 0.0
  %v402 = vmax.f32 %v386, 0.0
  %v403 = vmax.f32 %v387, 0.0
  %v404 = vmax.f32 %v210, %v388
  %v405 = vmax.f32 %v211, %v389
  %v406 = vmax.f32 %v212, %v390
  %v407 = vmax.f32 %v213, %v391
  %v408 = vmax.f32 %v214, %v392
  %v409 = vmax.f32 %v215, %v393
  %v410 = vmax.f32 %v216, %v394
  %v411 = vmax.f32 %v217, %v395
  %v412 = vmax.f32 %v218, %v396
  %v413 = vmax.f32 %v219, %v397
  %v414 = vmax.f32 %v220, %v398
  %v415 = vmax.f32 %v221, %v399
  %v416 = vmax.f32 %v222, %v400
  %v417 = vmax.f32 %v223, %v401
  %v418 = vmax.f32 %v224, %v402
  %v419 = vmax.f32 %v225, %v403
  %s420 = scalar_lea.vmem %s0, 128
  %v421 = vld [vmem:[%s420] sm:$0xf]
  %v422 = vld [vmem:[%s420 + $0x4] sm:$0xf]
  %v423 = vld [vmem:[%s420 + $0x8] sm:$0xf]
  %v424 = vld [vmem:[%s420 + $0xc] sm:$0xf]
  %v425 = vld [vmem:[%s420 + $0x10] sm:$0xf]
  %v426 = vld [vmem:[%s420 + $0x14] sm:$0xf]
  %v427 = vld [vmem:[%s420 + $0x18] sm:$0xf]
  %v428 = vld [vmem:[%s420 + $0x1c] sm:$0xf]
  %v429 = vld [vmem:[%s420 + $0x20] sm:$0xf]
  %v430 = vld [vmem:[%s420 + $0x24] sm:$0xf]
  %v431 = vld [vmem:[%s420 + $0x28] sm:$0xf]
  %v432 = vld [vmem:[%s420 + $0x2c] sm:$0xf]
  %v433 = vld [vmem:[%s420 + $0x30] sm:$0xf]
  %v434 = vld [vmem:[%s420 + $0x34] sm:$0xf]
  %v435 = vld [vmem:[%s420 + $0x38] sm:$0xf]
  %v436 = vld [vmem:[%s420 + $0x3c] sm:$0xf]
  %v453 = vunpack.c.l.b16 %v421
  %v454 = vunpack.c.l.b16 %v422
  %v455 = vunpack.c.l.b16 %v423
  %v456 = vunpack.c.l.b16 %v424
  %v457 = vunpack.c.l.b16 %v425
  %v458 = vunpack.c.l.b16 %v426
  %v459 = vunpack.c.l.b16 %v427
  %v460 = vunpack.c.l.b16 %v428
  %v461 = vunpack.c.l.b16 %v429
  %v462 = vunpack.c.l.b16 %v430
  %v463 = vunpack.c.l.b16 %v431
  %v464 = vunpack.c.l.b16 %v432
  %v465 = vunpack.c.l.b16 %v433
  %v466 = vunpack.c.l.b16 %v434
  %v467 = vunpack.c.l.b16 %v435
  %v468 = vunpack.c.l.b16 %v436
  %v469 = vpack.c.b16 %v454, %v453
  %v470 = vpack.c.b16 %v456, %v455
  %v471 = vpack.c.b16 %v458, %v457
  %v472 = vpack.c.b16 %v460, %v459
  %v473 = vpack.c.b16 %v462, %v461
  %v474 = vpack.c.b16 %v464, %v463
  %v475 = vpack.c.b16 %v466, %v465
  %v476 = vpack.c.b16 %v468, %v467
  %v478 = vsel %vm91, %v469, 0
  %v481 = vsel %vm91, %v470, 0
  %v484 = vsel %vm91, %v471, 0
  %v487 = vsel %vm91, %v472, 0
  %v490 = vsel %vm91, %v473, 0
  %v493 = vsel %vm91, %v474, 0
  %v496 = vsel %vm91, %v475, 0
  %v499 = vsel %vm91, %v476, 0
  %501 = vmatpush.bf16.msra.mxu0 0
  %502 = vmatpush.bf16.msra.mxu0 0
  %503 = vmatpush.bf16.msra.mxu0 0
  %504 = vmatpush.bf16.msra.mxu0 0
  %505 = vmatpush.bf16.msra.mxu0 0
  %506 = vmatpush.bf16.msra.mxu0 0
  %507 = vmatpush.bf16.msra.mxu0 %v121
  %508 = vmatpush.bf16.msra.mxu0 %v88
  %509 = vmatmul.bf16.gmra.mxu0 %v478
  %v510 = vpop.f32.mrf.mxu0
  %v511 = vadd.f32 0.0, %v510
  %v512 = vpop.f32.mrf.mxu0
  %v513 = vadd.f32 0.0, %v512
  %514 = vmatmul.bf16.gmra.mxu0 %v481
  %v515 = vpop.f32.mrf.mxu0
  %v516 = vadd.f32 0.0, %v515
  %v517 = vpop.f32.mrf.mxu0
  %v518 = vadd.f32 0.0, %v517
  %519 = vmatmul.bf16.gmra.mxu0 %v484
  %v520 = vpop.f32.mrf.mxu0
  %v521 = vadd.f32 0.0, %v520
  %v522 = vpop.f32.mrf.mxu0
  %v523 = vadd.f32 0.0, %v522
  %524 = vmatmul.bf16.gmra.mxu0 %v487
  %v525 = vpop.f32.mrf.mxu0
  %v526 = vadd.f32 0.0, %v525
  %v527 = vpop.f32.mrf.mxu0
  %v528 = vadd.f32 0.0, %v527
  %529 = vmatmul.bf16.gmra.mxu0 %v490
  %v530 = vpop.f32.mrf.mxu0
  %v531 = vadd.f32 0.0, %v530
  %v532 = vpop.f32.mrf.mxu0
  %v533 = vadd.f32 0.0, %v532
  %534 = vmatmul.bf16.gmra.mxu0 %v493
  %v535 = vpop.f32.mrf.mxu0
  %v536 = vadd.f32 0.0, %v535
  %v537 = vpop.f32.mrf.mxu0
  %v538 = vadd.f32 0.0, %v537
  %539 = vmatmul.bf16.gmra.mxu0 %v496
  %v540 = vpop.f32.mrf.mxu0
  %v541 = vadd.f32 0.0, %v540
  %v542 = vpop.f32.mrf.mxu0
  %v543 = vadd.f32 0.0, %v542
  %544 = vmatmul.bf16.gmra.mxu0 %v499
  %v545 = vpop.f32.mrf.mxu0
  %v546 = vadd.f32 0.0, %v545
  %v547 = vpop.f32.mrf.mxu0
  %v548 = vadd.f32 0.0, %v547
  %549 = vdwg.mxu0
  %v550 = vmul.f32 %v511, %v173
  %v551 = vmul.f32 %v513, %v173
  %v552 = vmul.f32 %v516, %v173
  %v553 = vmul.f32 %v518, %v173
  %v554 = vmul.f32 %v521, %v173
  %v555 = vmul.f32 %v523, %v173
  %v556 = vmul.f32 %v526, %v173
  %v557 = vmul.f32 %v528, %v173
  %v558 = vmul.f32 %v531, %v173
  %v559 = vmul.f32 %v533, %v173
  %v560 = vmul.f32 %v536, %v173
  %v561 = vmul.f32 %v538, %v173
  %v562 = vmul.f32 %v541, %v173
  %v563 = vmul.f32 %v543, %v173
  %v564 = vmul.f32 %v546, %v173
  %v565 = vmul.f32 %v548, %v173
  %v566 = vadd.f32 %v550, %v192
  %v567 = vadd.f32 %v551, %v192
  %v568 = vadd.f32 %v552, %v192
  %v569 = vadd.f32 %v553, %v192
  %v570 = vadd.f32 %v554, %v192
  %v571 = vadd.f32 %v555, %v192
  %v572 = vadd.f32 %v556, %v192
  %v573 = vadd.f32 %v557, %v192
  %v574 = vadd.f32 %v558, %v192
  %v575 = vadd.f32 %v559, %v192
  %v576 = vadd.f32 %v560, %v192
  %v577 = vadd.f32 %v561, %v192
  %v578 = vadd.f32 %v562, %v192
  %v579 = vadd.f32 %v563, %v192
  %v580 = vadd.f32 %v564, %v192
  %v581 = vadd.f32 %v565, %v192
  %v582 = vmax.f32 %v566, 0.0
  %v583 = vmax.f32 %v567, 0.0
  %v584 = vmax.f32 %v568, 0.0
  %v585 = vmax.f32 %v569, 0.0
  %v586 = vmax.f32 %v570, 0.0
  %v587 = vmax.f32 %v571, 0.0
  %v588 = vmax.f32 %v572, 0.0
  %v589 = vmax.f32 %v573, 0.0
  %v590 = vmax.f32 %v574, 0.0
  %v591 = vmax.f32 %v575, 0.0
  %v592 = vmax.f32 %v576, 0.0
  %v593 = vmax.f32 %v577, 0.0
  %v594 = vmax.f32 %v578, 0.0
  %v595 = vmax.f32 %v579, 0.0
  %v596 = vmax.f32 %v580, 0.0
  %v597 = vmax.f32 %v581, 0.0
  %v598 = vmax.f32 %v404, %v582
  %v599 = vmax.f32 %v405, %v583
  %v600 = vmax.f32 %v406, %v584
  %v601 = vmax.f32 %v407, %v585
  %v602 = vmax.f32 %v408, %v586
  %v603 = vmax.f32 %v409, %v587
  %v604 = vmax.f32 %v410, %v588
  %v605 = vmax.f32 %v411, %v589
  %v606 = vmax.f32 %v412, %v590
  %v607 = vmax.f32 %v413, %v591
  %v608 = vmax.f32 %v414, %v592
  %v609 = vmax.f32 %v415, %v593
  %v610 = vmax.f32 %v416, %v594
  %v611 = vmax.f32 %v417, %v595
  %v612 = vmax.f32 %v418, %v596
  %v613 = vmax.f32 %v419, %v597
  %s614 = scalar_lea.vmem %s0, 192
  %v615 = vld [vmem:[%s614] sm:$0xf]
  %v616 = vld [vmem:[%s614 + $0x4] sm:$0xf]
  %v617 = vld [vmem:[%s614 + $0x8] sm:$0xf]
  %v618 = vld [vmem:[%s614 + $0xc] sm:$0xf]
  %v619 = vld [vmem:[%s614 + $0x10] sm:$0xf]
  %v620 = vld [vmem:[%s614 + $0x14] sm:$0xf]
  %v621 = vld [vmem:[%s614 + $0x18] sm:$0xf]
  %v622 = vld [vmem:[%s614 + $0x1c] sm:$0xf]
  %v623 = vld [vmem:[%s614 + $0x20] sm:$0xf]
  %v624 = vld [vmem:[%s614 + $0x24] sm:$0xf]
  %v625 = vld [vmem:[%s614 + $0x28] sm:$0xf]
  %v626 = vld [vmem:[%s614 + $0x2c] sm:$0xf]
  %v627 = vld [vmem:[%s614 + $0x30] sm:$0xf]
  %v628 = vld [vmem:[%s614 + $0x34] sm:$0xf]
  %v629 = vld [vmem:[%s614 + $0x38] sm:$0xf]
  %v630 = vld [vmem:[%s614 + $0x3c] sm:$0xf]
  %v647 = vunpack.c.l.b16 %v615
  %v648 = vunpack.c.l.b16 %v616
  %v649 = vunpack.c.l.b16 %v617
  %v650 = vunpack.c.l.b16 %v618
  %v651 = vunpack.c.l.b16 %v619
  %v652 = vunpack.c.l.b16 %v620
  %v653 = vunpack.c.l.b16 %v621
  %v654 = vunpack.c.l.b16 %v622
  %v655 = vunpack.c.l.b16 %v623
  %v656 = vunpack.c.l.b16 %v624
  %v657 = vunpack.c.l.b16 %v625
  %v658 = vunpack.c.l.b16 %v626
  %v659 = vunpack.c.l.b16 %v627
  %v660 = vunpack.c.l.b16 %v628
  %v661 = vunpack.c.l.b16 %v629
  %v662 = vunpack.c.l.b16 %v630
  %v663 = vpack.c.b16 %v648, %v647
  %v664 = vpack.c.b16 %v650, %v649
  %v665 = vpack.c.b16 %v652, %v651
  %v666 = vpack.c.b16 %v654, %v653
  %v667 = vpack.c.b16 %v656, %v655
  %v668 = vpack.c.b16 %v658, %v657
  %v669 = vpack.c.b16 %v660, %v659
  %v670 = vpack.c.b16 %v662, %v661
  %v672 = vsel %vm91, %v663, 0
  %v675 = vsel %vm91, %v664, 0
  %v678 = vsel %vm91, %v665, 0
  %v681 = vsel %vm91, %v666, 0
  %v684 = vsel %vm91, %v667, 0
  %v687 = vsel %vm91, %v668, 0
  %v690 = vsel %vm91, %v669, 0
  %v693 = vsel %vm91, %v670, 0
  %695 = vmatpush.bf16.msra.mxu0 0
  %696 = vmatpush.bf16.msra.mxu0 0
  %697 = vmatpush.bf16.msra.mxu0 0
  %698 = vmatpush.bf16.msra.mxu0 0
  %699 = vmatpush.bf16.msra.mxu0 0
  %700 = vmatpush.bf16.msra.mxu0 0
  %701 = vmatpush.bf16.msra.mxu0 %v121
  %702 = vmatpush.bf16.msra.mxu0 %v88
  %703 = vmatmul.bf16.gmra.mxu0 %v672
  %v704 = vpop.f32.mrf.mxu0
  %v705 = vadd.f32 0.0, %v704
  %v706 = vpop.f32.mrf.mxu0
  %v707 = vadd.f32 0.0, %v706
  %708 = vmatmul.bf16.gmra.mxu0 %v675
  %v709 = vpop.f32.mrf.mxu0
  %v710 = vadd.f32 0.0, %v709
  %v711 = vpop.f32.mrf.mxu0
  %v712 = vadd.f32 0.0, %v711
  %713 = vmatmul.bf16.gmra.mxu0 %v678
  %v714 = vpop.f32.mrf.mxu0
  %v715 = vadd.f32 0.0, %v714
  %v716 = vpop.f32.mrf.mxu0
  %v717 = vadd.f32 0.0, %v716
  %718 = vmatmul.bf16.gmra.mxu0 %v681
  %v719 = vpop.f32.mrf.mxu0
  %v720 = vadd.f32 0.0, %v719
  %v721 = vpop.f32.mrf.mxu0
  %v722 = vadd.f32 0.0, %v721
  %723 = vmatmul.bf16.gmra.mxu0 %v684
  %v724 = vpop.f32.mrf.mxu0
  %v725 = vadd.f32 0.0, %v724
  %v726 = vpop.f32.mrf.mxu0
  %v727 = vadd.f32 0.0, %v726
  %728 = vmatmul.bf16.gmra.mxu0 %v687
  %v729 = vpop.f32.mrf.mxu0
  %v730 = vadd.f32 0.0, %v729
  %v731 = vpop.f32.mrf.mxu0
  %v732 = vadd.f32 0.0, %v731
  %733 = vmatmul.bf16.gmra.mxu0 %v690
  %v734 = vpop.f32.mrf.mxu0
  %v735 = vadd.f32 0.0, %v734
  %v736 = vpop.f32.mrf.mxu0
  %v737 = vadd.f32 0.0, %v736
  %738 = vmatmul.bf16.gmra.mxu0 %v693
  %v739 = vpop.f32.mrf.mxu0
  %v740 = vadd.f32 0.0, %v739
  %v741 = vpop.f32.mrf.mxu0
  %v742 = vadd.f32 0.0, %v741
  %743 = vdwg.mxu0
  %v744 = vmul.f32 %v705, %v173
  %v745 = vmul.f32 %v707, %v173
  %v746 = vmul.f32 %v710, %v173
  %v747 = vmul.f32 %v712, %v173
  %v748 = vmul.f32 %v715, %v173
  %v749 = vmul.f32 %v717, %v173
  %v750 = vmul.f32 %v720, %v173
  %v751 = vmul.f32 %v722, %v173
  %v752 = vmul.f32 %v725, %v173
  %v753 = vmul.f32 %v727, %v173
  %v754 = vmul.f32 %v730, %v173
  %v755 = vmul.f32 %v732, %v173
  %v756 = vmul.f32 %v735, %v173
  %v757 = vmul.f32 %v737, %v173
  %v758 = vmul.f32 %v740, %v173
  %v759 = vmul.f32 %v742, %v173
  %v760 = vadd.f32 %v744, %v192
  %v761 = vadd.f32 %v745, %v192
  %v762 = vadd.f32 %v746, %v192
  %v763 = vadd.f32 %v747, %v192
  %v764 = vadd.f32 %v748, %v192
  %v765 = vadd.f32 %v749, %v192
  %v766 = vadd.f32 %v750, %v192
  %v767 = vadd.f32 %v751, %v192
  %v768 = vadd.f32 %v752, %v192
  %v769 = vadd.f32 %v753, %v192
  %v770 = vadd.f32 %v754, %v192
  %v771 = vadd.f32 %v755, %v192
  %v772 = vadd.f32 %v756, %v192
  %v773 = vadd.f32 %v757, %v192
  %v774 = vadd.f32 %v758, %v192
  %v775 = vadd.f32 %v759, %v192
  %v776 = vmax.f32 %v760, 0.0
  %v777 = vmax.f32 %v761, 0.0
  %v778 = vmax.f32 %v762, 0.0
  %v779 = vmax.f32 %v763, 0.0
  %v780 = vmax.f32 %v764, 0.0
  %v781 = vmax.f32 %v765, 0.0
  %v782 = vmax.f32 %v766, 0.0
  %v783 = vmax.f32 %v767, 0.0
  %v784 = vmax.f32 %v768, 0.0
  %v785 = vmax.f32 %v769, 0.0
  %v786 = vmax.f32 %v770, 0.0
  %v787 = vmax.f32 %v771, 0.0
  %v788 = vmax.f32 %v772, 0.0
  %v789 = vmax.f32 %v773, 0.0
  %v790 = vmax.f32 %v774, 0.0
  %v791 = vmax.f32 %v775, 0.0
  %v792 = vmax.f32 %v598, %v776
  %v793 = vmax.f32 %v599, %v777
  %v794 = vmax.f32 %v600, %v778
  %v795 = vmax.f32 %v601, %v779
  %v796 = vmax.f32 %v602, %v780
  %v797 = vmax.f32 %v603, %v781
  %v798 = vmax.f32 %v604, %v782
  %v799 = vmax.f32 %v605, %v783
  %v800 = vmax.f32 %v606, %v784
  %v801 = vmax.f32 %v607, %v785
  %v802 = vmax.f32 %v608, %v786
  %v803 = vmax.f32 %v609, %v787
  %v804 = vmax.f32 %v610, %v788
  %v805 = vmax.f32 %v611, %v789
  %v806 = vmax.f32 %v612, %v790
  %v807 = vmax.f32 %v613, %v791
  %vm808 = vcmask 261120
  %809 = vst.msk [vmem:[%s4] sm:$0xff] %vm808, %v792
  %810 = vst.msk [vmem:[%s4 + $0x8] sm:$0xff] %vm808, %v793
  %811 = vst.msk [vmem:[%s4 + $0x10] sm:$0xff] %vm808, %v794
  %812 = vst.msk [vmem:[%s4 + $0x18] sm:$0xff] %vm808, %v795
  %813 = vst.msk [vmem:[%s4 + $0x20] sm:$0xff] %vm808, %v796
  %814 = vst.msk [vmem:[%s4 + $0x28] sm:$0xff] %vm808, %v797
  %815 = vst.msk [vmem:[%s4 + $0x30] sm:$0xff] %vm808, %v798
  %816 = vst.msk [vmem:[%s4 + $0x38] sm:$0xff] %vm808, %v799
  %817 = vst.msk [vmem:[%s4 + $0x40] sm:$0xff] %vm808, %v800
  %818 = vst.msk [vmem:[%s4 + $0x48] sm:$0xff] %vm808, %v801
  %819 = vst.msk [vmem:[%s4 + $0x50] sm:$0xff] %vm808, %v802
  %820 = vst.msk [vmem:[%s4 + $0x58] sm:$0xff] %vm808, %v803
  %821 = vst.msk [vmem:[%s4 + $0x60] sm:$0xff] %vm808, %v804
  %822 = vst.msk [vmem:[%s4 + $0x68] sm:$0xff] %vm808, %v805
  %823 = vst.msk [vmem:[%s4 + $0x70] sm:$0xff] %vm808, %v806
  %824 = vst.msk [vmem:[%s4 + $0x78] sm:$0xff] %vm808, %v807
  // Predicated region
  $region18: #{tpu_custom_call.1} parent=0 // pred_check
    _
  $region19: #{tpu_custom_call.1} parent=0 // pred_check_branch
    %826 = sbr.rel (0) target = $region21
  $region20: #{tpu_custom_call.1} parent=0 // pred_region
    _
  $region21: #{tpu_custom_call.1} parent=0 // pred_fallthru
    _
  // Predicated region
  $region22: #{tpu_custom_call.1} parent=0 // pred_check
    _
  $region23: #{tpu_custom_call.1} parent=0 // pred_check_branch
    %828 = sbr.rel (0) target = $region25
  $region24: #{tpu_custom_call.1} parent=0 // pred_region
    _
  $region25: #{tpu_custom_call.1} parent=0 // pred_fallthru
    _

</llo_original>
